<compile_context>
chip_gen: v6e
topology: v6e:2x2x1
jax: 0.10.0
libtpu: 0.0.40
codegen_flags: <defaults>
</compile_context>

<pallas_src>
import functools
import re

import jax
import jax.numpy as jnp
from jax.experimental import pallas as pl
from jax.experimental.pallas import tpu as pltpu

_LANE = 128
_MAX_ROW_BYTES = 128 << 10   # cap on padded lane-row footprint for ragged cols
_MIN_LANE_UTIL = 0.375       # below this, masked-lane compute waste beats the
                             # padded fallback's extra HBM traffic


def _round_up(v, m):
    return -(-v // m) * m


def _sublane_multiple(dtype):
    # Min second-to-last block granularity: 8 (4-byte), 16 (2-byte), 32 (1-byte).
    return max(8, 32 // jnp.dtype(dtype).itemsize)


@functools.lru_cache(maxsize=None)
def _chip_generation():
    """Best-effort TPU generation number (5, 6, 7, ...); 0 if unknown."""
    try:
        kind = jax.devices()[0].device_kind
    except Exception:
        return 0
    m = re.search(r"(\d+)", kind)
    return int(m.group(1)) if m else 0


def _tuning():
    """(target block bytes, min grid steps) per TPU generation."""
    if _chip_generation() >= 7:
        # v7x: ~3.2 TB/s HBM -> bigger blocks to amortize the ~0.35us/step grid
        # overhead; 4 MiB x (2 in + 2 out bufs) = 16 MiB << 32 MiB scoped VMEM.
        # >= 4 steps => >= 2 blocks per TensorCore, so each core still pipelines.
        return 4 << 20, 4
    # v5e/v6e: 1 MiB is past the measured ~512 KiB knee; 4 x 1 MiB buffers stay
    # far below v5e's 16 MiB scoped-VMEM default.
    return 1 << 20, 2


def _snake_kernel(x_ref, o_ref, *, a, inv_a):
    # f32 math (mandatory on v5e: no bf16 VPU/EUP); cast back on store so HBM
    # traffic stays in the narrow I/O dtype.
    # TODO(synk): per perf review, with bf16/f16 I/O on v6e/v7x the f32 sin
    # expansion (range reduction + VPU polynomial) may bind before HBM BW;
    # confirm with a bundle dump before trading accuracy for a shorter poly.
    x = x_ref[...].astype(jnp.float32)
    s = jnp.sin(a * x)
    o_ref[...] = (x + (s * s) * inv_a).astype(o_ref.dtype)


def _choose_2d_view(n, itemsize):
    """Factor n == rows*cols (metadata-only reshape) maximizing lane (last-dim)
    utilization.  Returns (rows, cols) or None if no acceptable factorization."""
    if n % _LANE == 0:
        return n // _LANE, _LANE                     # fully lane-dense
    best_score, best = None, None
    d = 1
    while d * d <= n:
        if n % d == 0:
            for c in (d, n // d):
                padded = _round_up(c, _LANE)
                if padded * itemsize > _MAX_ROW_BYTES:
                    continue
                score = (c / padded, c)              # utilization, then width
                if best_score is None or score > best_score:
                    best_score, best = score, (n // c, c)
        d += 1
    if best is None or best_score[0] < _MIN_LANE_UTIL:
        return None
    return best


def _block_rows(rows, padded_cols, itemsize, sub, target_bytes, min_steps):
    if rows <= sub:
        return rows                                  # full-dim block (always legal)
    row_bytes = padded_cols * itemsize
    target_rows = max(sub, (target_bytes // row_bytes) // sub * sub)
    # Prefer >= min_steps grid steps: DMA/compute overlap, and >= 2 blocks per
    # TensorCore on v7x so "parallel" sharding still pipelines within each core.
    step_cap = _round_up(pl.cdiv(rows, min_steps), sub)
    return min(max(sub, min(target_rows, step_cap)), rows)


def _run(kernel, x2d, rows, cols, block_rows, dtype):
    return pl.pallas_call(
        kernel,
        out_shape=jax.ShapeDtypeStruct((rows, cols), dtype),
        grid_spec=pltpu.PrefetchScalarGridSpec(
            num_scalar_prefetch=0,
            grid=(pl.cdiv(rows, block_rows),),
            in_specs=[pl.BlockSpec((block_rows, cols), lambda i: (i, 0))],
            out_specs=pl.BlockSpec((block_rows, cols), lambda i: (i, 0)),
        ),
        compiler_params=pltpu.CompilerParams(
            dimension_semantics=("parallel",)),
    )(x2d)


@functools.partial(jax.jit, static_argnames=("a",))
def _snake(x, a):
    orig_shape = x.shape
    if not jnp.issubdtype(x.dtype, jnp.floating):
        x = x.astype(jnp.float32)   # torch.sin requires float; promote (documented)
    dtype = x.dtype
    n = x.size
    if n == 0:
        return jnp.reshape(x, orig_shape)

    a = float(a)
    # a == 0 mirrors torch (0/0 -> NaN); the analytic limit a->0 would be y = x.
    inv_a = (1.0 / a) if a != 0.0 else float("inf")

    itemsize = jnp.dtype(dtype).itemsize
    sub = _sublane_multiple(dtype)
    target_bytes, min_steps = _tuning()
    kernel = functools.partial(_snake_kernel, a=a, inv_a=inv_a)

    view = _choose_2d_view(n, itemsize)
    if view is not None:
        # Pad/slice-free path: reshape is pure metadata; HBM traffic is exactly
        # one read + one write of the tensor.
        rows, cols = view
        padded_cols = _round_up(cols, _LANE)
        x2d = jnp.reshape(x, (rows, cols))
        br = _block_rows(rows, padded_cols, itemsize, sub, target_bytes, min_steps)
        out2d = _run(kernel, x2d, rows, cols, br, dtype)
        return jnp.reshape(out2d, orig_shape)

    # Rare fallback (e.g. huge prime element count): padded lane-dense slab.
    rows = pl.cdiv(n, _LANE)
    x2d = jnp.pad(jnp.ravel(x), (0, rows * _LANE - n)).reshape(rows, _LANE)
    br = _block_rows(rows, _LANE, itemsize, sub, target_bytes, min_steps)
    out2d = _run(kernel, x2d, rows, _LANE, br, dtype)
    return jnp.reshape(out2d.reshape(-1)[:n], orig_shape)


def snake(x, a=5):
    """Snake activation, elementwise: x + sin(a*x)**2 / a (matches PyTorch).

    `a` must be a Python scalar (it is a module hyperparameter); distinct
    values of `a` trigger recompilation.
    """
    return _snake(x, a=float(a))


if __name__ == "__main__":
    key = jax.random.PRNGKey(0)
    x = jax.random.normal(key, (2, 4, 16, 16), dtype=jnp.float32)

    # Primary check (matches the PyTorch module with a=5).
    y = jax.block_until_ready(snake(x, a=5))
    y_ref = x + jnp.sin(5.0 * x) ** 2 / 5.0
    assert y.shape == x.shape and y.dtype == x.dtype
    assert jnp.allclose(y, y_ref, atol=1e-6, rtol=1e-6)

    # Ragged total size: exercises the pad-free (rows, cols) factorized path.
    x2 = jax.random.normal(jax.random.PRNGKey(1), (3, 7, 5), dtype=jnp.float32)
    y2 = jax.block_until_ready(snake(x2, a=5))
    y2_ref = x2 + jnp.sin(5.0 * x2) ** 2 / 5.0
    assert y2.shape == x2.shape
    assert jnp.allclose(y2, y2_ref, atol=1e-6, rtol=1e-6)

    # bf16 I/O: narrow HBM traffic, f32 math inside the kernel.
    xb = x.astype(jnp.bfloat16)
    yb = jax.block_until_ready(snake(xb, a=5))
    xb_f32 = xb.astype(jnp.float32)
    yb_ref = xb_f32 + jnp.sin(5.0 * xb_f32) ** 2 / 5.0
    assert yb.shape == xb.shape and yb.dtype == jnp.bfloat16
    assert jnp.allclose(yb.astype(jnp.float32), yb_ref, atol=2e-2, rtol=2e-2)

    print("KERNEL_OK")
</pallas_src>

<mosaic_0001>
module attributes {stable_mosaic.version = 11 : i64} {
  func.func @_snake_kernel(%arg0: i32, %arg1: memref<8x128xf32, #tpu.memory_space<vmem>>, %arg2: memref<8x128xf32, #tpu.memory_space<vmem>>) attributes {dimension_semantics = [#tpu.dimension_semantics<parallel>], iteration_bounds = array<i64: 2>, scalar_prefetch = 0 : i64, scratch_operands = 0 : i64, tpu.core_type = #tpu.core_type<tc>, window_params = [{transform_indices = @transform_0, window_bounds = array<i64: 8, 128>}, {transform_indices = @transform_1, window_bounds = array<i64: 8, 128>}]} {
    %c0 = arith.constant 0 : index
    %c0_0 = arith.constant 0 : index
    %0 = vector.load %arg1[%c0, %c0_0] : memref<8x128xf32, #tpu.memory_space<vmem>>, vector<8x128xf32>
    %cst = arith.constant 5.000000e+00 : f32
    %1 = vector.broadcast %cst : f32 to vector<8x128xf32>
    %2 = arith.mulf %1, %0 : vector<8x128xf32>
    %3 = math.sin %2 : vector<8x128xf32>
    %4 = arith.mulf %3, %3 : vector<8x128xf32>
    %cst_1 = arith.constant 2.000000e-01 : f32
    %5 = vector.broadcast %cst_1 : f32 to vector<8x128xf32>
    %6 = arith.mulf %4, %5 : vector<8x128xf32>
    %7 = arith.addf %0, %6 : vector<8x128xf32>
    %c0_2 = arith.constant 0 : index
    %c0_3 = arith.constant 0 : index
    %8 = vector.load %arg2[%c0_2, %c0_3] : memref<8x128xf32, #tpu.memory_space<vmem>>, vector<8x128xf32>
    tpu.vector_store %arg2[%c0_2, %c0_3], %7 {strides = array<i32>} : memref<8x128xf32, #tpu.memory_space<vmem>>, vector<8x128xf32>,
    return
  }
  func.func @transform_0(%arg0: i32) -> (i32, i32) {
    %c0_i32 = arith.constant 0 : i32
    %c0_i32_0 = arith.constant 0 : i32
    return %arg0, %c0_i32 : i32, i32
  }
  func.func @transform_1(%arg0: i32) -> (i32, i32) {
    %c0_i32 = arith.constant 0 : i32
    %c0_i32_0 = arith.constant 0 : i32
    return %arg0, %c0_i32 : i32, i32
  }
}

</mosaic_0001>

<llo_original>
// kernel: _snake.1
$region0: #{_snake.1}
  #allocation0 [shape = 'u32[]', space=smem, size = 0x4, offset = 0x4, fixed_abs, tag = 'smem constant byte address 0x4 - core index']
  #allocation1 [shape = 'u32[144,128]{1,0:T(1,128)}', space=vmem, size = 0x12000, scoped, tag = 'internal scratch']
  %s0 = inlined_call_operand.vmem [shape: f32[16,128], index: 0, kind: input, shape index: {}]
  %s1 = inlined_call_operand.vmem [shape: f32[16,128], index: 1, kind: output, shape index: {}]
  %s2 = sld [smem:[#allocation0]]
  $region37: #{_snake.1} parent=0
    _
  %s4 = ssub.s32 1, %s2
  %s5 = scalar_select 0, %s4, %s2
  loop: start=0, step=1, limit=4
  $region2: #{_snake.1} parent=0 // loop_pre_header
    _
  $region3: #{_snake.1} parent=0 // loop_header
    %s7 = sphi 0, %s11
    %p8 = scmp.ge.s32.totalorder %s7, 4
    %s17 = sphi 0, %s19
    %s20 = sphi 0, %s17
    %s21 = sphi 0, %s20
    %s37 = sphi 0, %s21
    %s43 = sphi 0, %s45
    %s46 = sphi 0, %s43
    %s47 = sphi 0, %s46
    %s63 = sphi 0, %s47
  $region4: #{_snake.1} parent=0 // loop_header_branch
    %10 = sbr.rel (%p8) target = $region8
  $region5: #{_snake.1} parent=0 // loop_body
    %s12 = ssub.s32 %s7, 1
    %s13 = ssub.s32 %s7, 2
    %s14 = sadd.s32 %s7, 1
    %s15 = ssub.s32 %s7, %s14
    %p16 = scmp.eq.s32.totalorder %s15, 0
    %s18 = sadd.s32 %s17, 1
    %s19 = scalar_select %p16, %s17, %s18
    %p22 = pneg %p16
    %p23 = scmp.eq.s32.totalorder %s7, 1
    %p24 = por %p22, %p23
    %p25 = scmp.ne.s32.totalorder %s17, %s20
    %p26 = scmp.eq.s32.totalorder %s7, 0
    %p27 = por %p25, %p26
    %p28 = scmp.ne.s32.totalorder %s17, %s20
    %p29 = scmp.eq.s32.totalorder %s12, 1
    %p30 = por %p28, %p29
    %p31 = scmp.ne.s32.totalorder %s20, %s21
    %p32 = scmp.eq.s32.totalorder %s12, 0
    %p33 = por %p31, %p32
    %p34 = scmp.ne.s32.totalorder %s20, %s21
    %p35 = scmp.eq.s32.totalorder %s13, 1
    %p36 = por %p34, %p35
    %p38 = scmp.ne.s32.totalorder %s21, %s37
    %p39 = scmp.eq.s32.totalorder %s13, 0
    %p40 = por %p38, %p39
    %s41 = ssub.s32 %s7, %s14
    %p42 = scmp.eq.s32.totalorder %s41, 0
    %s44 = sadd.s32 %s43, 1
    %s45 = scalar_select %p42, %s43, %s44
    %p48 = pneg %p42
    %p49 = scmp.eq.s32.totalorder %s7, 1
    %p50 = por %p48, %p49
    %p51 = scmp.ne.s32.totalorder %s43, %s46
    %p52 = scmp.eq.s32.totalorder %s7, 0
    %p53 = por %p51, %p52
    %p54 = scmp.ne.s32.totalorder %s43, %s46
    %p55 = scmp.eq.s32.totalorder %s12, 1
    %p56 = por %p54, %p55
    %p57 = scmp.ne.s32.totalorder %s46, %s47
    %p58 = scmp.eq.s32.totalorder %s12, 0
    %p59 = por %p57, %p58
    %p60 = scmp.ne.s32.totalorder %s46, %s47
    %p61 = scmp.eq.s32.totalorder %s13, 1
    %p62 = por %p60, %p61
    %p64 = scmp.ne.s32.totalorder %s47, %s63
    %p65 = scmp.eq.s32.totalorder %s13, 0
    %p66 = por %p64, %p65
    %p67 = scmp.le.s32.totalorder 1, %s7
    %p68 = scmp.lt.s32.totalorder %s7, 3
    %p69 = pnand %p67, %p68
    %p70 = pneg %p69
    // Predicated region
    $region9: #{_snake.1} parent=5 // pred_check
      _
    $region10: #{_snake.1} parent=5 // pred_check_branch
      %72 = sbr.rel (%p69) target = $region12
    $region11: #{_snake.1} parent=5 // pred_region
      %s73 = ssub.s32 %s7, 1
    $region12: #{_snake.1} parent=5 // pred_fallthru
      _
    %p74 = scmp.lt.s32.totalorder %s7, 2
    // Predicated region
    $region13: #{_snake.1} parent=5 // pred_check
      %p75 = pneg %p74
    $region14: #{_snake.1} parent=5 // pred_check_branch
      %77 = sbr.rel (%p75) target = $region16
    $region15: #{_snake.1} parent=5 // pred_region
      // Predicated region
      $region17: #{_snake.1} parent=15 // pred_check
        %p78 = pneg %p27
      $region18: #{_snake.1} parent=15 // pred_check_branch
        %80 = sbr.rel (%p78) target = $region20
      $region19: #{_snake.1} parent=15 // pred_region
        %p81 = scmp.lt.s32.totalorder %s7, 1
        %s82 = scalar_select %p81, %s7, 1
        %s83 = smul.addr %s82, 8
        %s84 = scalar_lea.vmem %s0, %s83
      $region20: #{_snake.1} parent=15 // pred_fallthru
        _
    $region16: #{_snake.1} parent=5 // pred_fallthru
      _
    %p85 = scmp.le.s32.totalorder 1, %s7
    %p86 = scmp.lt.s32.totalorder %s7, 3
    %p87 = pnand %p85, %p86
    %p88 = pneg %p87
    // Predicated region
    $region21: #{_snake.1} parent=5 // pred_check
      _
    $region22: #{_snake.1} parent=5 // pred_check_branch
      %90 = sbr.rel (%p87) target = $region24
    $region23: #{_snake.1} parent=5 // pred_region
      %s91 = ssub.s32 %s7, 1
      %p92 = scmp.lt.s32.totalorder %s12, 1
      %s93 = scalar_select %p92, %s12, 1
      %s94 = smul.addr %s93, 8
      %s95 = scalar_lea.vmem %s0, %s94
      %p96 = pneg %p33
      %p97 = pneg %p30
      %p98 = pneg %p59
      %p99 = pneg %p56
      %p100 = scmp.lt.s32.totalorder %s12, 1
      %s101 = scalar_select %p100, %s12, 1
      %s102 = smul.addr %s101, 8
      %s103 = scalar_lea.vmem %s1, %s102
      %p104 = scmp.lt.s32.totalorder %s12, 1
      %s105 = scalar_select %p104, %s12, 1
      %s106 = smul.addr %s105, 8
      %s107 = scalar_lea.vmem %s0, %s106
      %p108 = scmp.lt.s32.totalorder %s12, 1
      %s109 = scalar_select %p108, %s12, 1
      %s110 = smul.addr %s109, 8
      %s111 = scalar_lea.vmem %s1, %s110
      %v112 = vld [vmem:[%s107] sm:$0xff]
      %v113 = vmul.f32 %v112, 5.0
      %v114 = vand.u32 2147483647, %v113
      %vm115 = vcmp.le.f32.partialorder %v114, 0.7853982
      %vm116 = vcmp.lt.s32.totalorder %v113, 0
      %v117 = vand.u32 %v113, 2139095040
      %v118 = vshrl.u32 %v117, 23
      %v119 = vsub.s32 %v118, 127
      %v120 = vand.u32 2147483647, %v113
      %v121 = vand.u32 %v120, 8388607
      %v122 = vor.u32 %v121, 8388608
      %v123 = vsub.s32 0, %v122
      %v124 = vadd.s32 %v119, 1
      %vm125 = vcmp.gt.s32.totalorder %v124, 0
      %v126 = vsel %vm125, %v124, 0
      %v127 = vshrl.u32 %v126, 5
      %v128 = vand.u32 %v126, 31
      %v129 = vsub.s32 32, %v128
      %v130 = vshrl.u32 683565275, %v129
      %v131 = vshll.u32 683565275, %v128
      %v132 = vshrl.u32 2475754826, %v129
      %v133 = vor.u32 %v131, %v132
      %v134 = vshll.u32 2475754826, %v128
      %v135 = vshrl.u32 2131351028, %v129
      %v136 = vor.u32 %v134, %v135
      %v137 = vshll.u32 2131351028, %v128
      %v138 = vshrl.u32 2102212464, %v129
      %v139 = vor.u32 %v137, %v138
      %v140 = vshll.u32 2102212464, %v128
      %v141 = vshrl.u32 920167782, %v129
      %v142 = vor.u32 %v140, %v141
      %v143 = vshll.u32 920167782, %v128
      %v144 = vshrl.u32 1326507024, %v129
      %v145 = vor.u32 %v143, %v144
      %vm146 = vcmp.lt.s32.totalorder %v127, 1
      %vm147 = vcmp.lt.s32.totalorder %v127, 2
      %vm148 = vcmp.lt.s32.totalorder %v127, 3
      %vm149 = vcmp.lt.s32.totalorder %v127, 4
      %v150 = vsel %vm146, %v130, %v133
      %v151 = vsel %vm149, %v139, 2102212464
      %v152 = vsel %vm148, %v136, %v151
      %v153 = vsel %vm147, %v150, %v152
      %v154 = vsel %vm146, %v133, %v136
      %v155 = vsel %vm149, %v142, 920167782
      %v156 = vsel %vm148, %v139, %v155
      %v157 = vsel %vm147, %v154, %v156
      %v158 = vsel %vm146, %v136, %v139
      %v159 = vsel %vm149, %v145, 1326507024
      %v160 = vsel %vm148, %v142, %v159
      %v161 = vsel %vm147, %v158, %v160
      %v162 = vshll.u32 %v122, 8
      %v163 = vmul.u32.u64.compose %v162, %v161
      %v164 = vextract.low.u32 %v163
      %v165 = vextract.high.u32 %v163
      %v166 = vmul.u32.u64.compose %v162, %v157
      %v167 = vextract.low.u32 %v166
      %v168 = vextract.high.u32 %v166
      %v169 = vmul.u32 %v162, %v153
      %v170 = vadd.s32 %v165, %v167
      %vm171 = vc.u32 %v165, %v167
      %v172 = vadd.s32 %v168, 1
      %v173 = vsel %vm171, %v172, %v168
      %v174 = vadd.s32 %v169, %v173
      %v175 = vadd.s32 %v174, 536870912
      %v176 = vshrl.u32 %v175, 30
      %v177 = vshll.u32 %v176, 30
      %v178 = vsub.s32 %v174, %v177
      %vm179 = vcmp.lt.s32.totalorder %v178, 0
      %v180 = vsub.s32 0, %v178
      %v181 = vsel %vm179, %v180, %v178
      %v182 = vclz %v181
      %v183 = vsub.s32 %v182, 2
      %vm184 = vcmp.gt.s32.totalorder 0, %v183
      %v185 = vsel %vm184, 0, %v183
      %v186 = vsub.s32 32, %v185
      %v187 = vshll.u32 %v178, %v185
      %v188 = vshrl.u32 %v170, %v186
      %v189 = vor.u32 %v187, %v188
      %v190 = vsub.s32 4294967266, %v185
      %v191 = vadd.s32 %v190, 127
      %v192 = vshll.u32 %v191, 23
      %v193 = vor.u32 4788187, %v192
      %v194 = vand.u32 2147483647, %v193
      %v196 = vcvt.s32.f32 %v189
      %v197 = vmul.f32 %v196, %v194
      %v198 = vxor.u32 %v197, 2147483648
      %v199 = vsel %vm116, %v198, %v197
      %v200 = vsub.s32 4, %v176
      %v201 = vsel %vm116, %v200, %v176
      %v202 = vsel %vm115, %v113, %v199
      %v203 = vsel %vm115, 0, %v201
      %v204 = vcosq.f32.pop %v202
      %v205 = vsinq.f32.pop %v202
      %vm206 = vweird.f32 %v113
      %v207 = vadd.s32 %v203, 3
      %v208 = vand.u32 %v207, 3
      %vm209 = vcmp.lt.s32.totalorder %v208, 2
      %vm210 = vcmp.eq.s32.totalorder %v208, 0
      %v211 = vxor.u32 %v205, 2147483648
      %v212 = vsel %vm210, %v204, %v211
      %vm213 = vcmp.eq.s32.totalorder %v208, 2
      %v214 = vxor.u32 %v204, 2147483648
      %v215 = vsel %vm213, %v214, %v205
      %v216 = vsel %vm209, %v212, %v215
      %v217 = vsel %vm206, nan, %v216
      %v218 = vmul.f32 %v217, %v217
      %v219 = vmul.f32 %v218, 0.2
      %v220 = vadd.f32 %v112, %v219
      %221 = vst [vmem:[%s111] sm:$0xff] %v220
      %p222 = scmp.lt.s32.totalorder %s12, 1
      %s223 = scalar_select %p222, %s12, 1
      %s224 = smul.addr %s223, 8
      %s225 = scalar_lea.vmem %s1, %s224
      // Predicated region
      $region25: #{_snake.1} parent=23 // pred_check
        %p226 = pneg %p56
      $region26: #{_snake.1} parent=23 // pred_check_branch
        %228 = sbr.rel (%p226) target = $region28
      $region27: #{_snake.1} parent=23 // pred_region
        _
      $region28: #{_snake.1} parent=23 // pred_fallthru
        _
    $region24: #{_snake.1} parent=5 // pred_fallthru
      _
    %p229 = scmp.le.s32.totalorder 2, %s7
    // Predicated region
    $region29: #{_snake.1} parent=5 // pred_check
      %p230 = pneg %p229
    $region30: #{_snake.1} parent=5 // pred_check_branch
      %232 = sbr.rel (%p230) target = $region32
    $region31: #{_snake.1} parent=5 // pred_region
      %s233 = ssub.s32 %s7, 2
      // Predicated region
      $region33: #{_snake.1} parent=31 // pred_check
        %p234 = pneg %p62
      $region34: #{_snake.1} parent=31 // pred_check_branch
        %236 = sbr.rel (%p234) target = $region36
      $region35: #{_snake.1} parent=31 // pred_region
        %p237 = scmp.lt.s32.totalorder %s13, 1
        %s238 = scalar_select %p237, %s13, 1
        %s239 = smul.addr %s238, 8
        %s240 = scalar_lea.vmem %s1, %s239
      $region36: #{_snake.1} parent=31 // pred_fallthru
        _
    $region32: #{_snake.1} parent=5 // pred_fallthru
      _
  $region6: #{_snake.1} parent=0 // loop_footer
    %s11 = sadd.s32 1, %s7
  $region7: #{_snake.1} parent=0 // loop_footer_branch
    %6 = sbr.rel target = $region3
  $region8: #{_snake.1} parent=0 // loop_exit
    _

</llo_original>
